<compile_context>
chip_gen: v5e
topology: v5e:2x2
jax: 0.10.0
libtpu: 0.0.40
codegen_flags: <defaults>
</compile_context>

<pallas_src>
import functools

import jax
import jax.numpy as jnp
from jax.experimental import pallas as pl
from jax.experimental.pallas import tpu as pltpu

_EPS = 1e-5                 # nn.InstanceNorm1d default eps
_SEED_MIX = 1000003093      # large odd int32 constant; decorrelates per-block streams


# ---------------------------------------------------------------------------
# Shared fused math.  get_z1 / get_z2 are thunks so the HW-PRNG path can
# consume z1 before z2 is drawn (only one noise slab live at a time).
# ---------------------------------------------------------------------------
def _augment_math(x_f32, get_z1, get_z2, *, alpha_scale, beta_scale, valid_d):
    d_block = x_f32.shape[-1]
    if valid_d == d_block:
        mean = jnp.mean(x_f32, axis=-1, keepdims=True)           # [tm, 1]
        diff = x_f32 - mean
    else:
        # Lane-padded block: restrict the statistics to the true D columns.
        col = jax.lax.broadcasted_iota(jnp.int32, x_f32.shape, dimension=1)
        mask = col < valid_d
        xm = jnp.where(mask, x_f32, 0.0)
        mean = jnp.sum(xm, axis=-1, keepdims=True) * (1.0 / valid_d)
        diff = jnp.where(mask, x_f32 - mean, 0.0)

    ssq = jnp.sum(diff * diff, axis=-1, keepdims=True)            # [tm, 1]
    # InstanceNorm1d (no affine): biased variance + eps.
    normed = diff * jax.lax.rsqrt(ssq * (1.0 / valid_d) + _EPS)
    # torch.std_mean default: UNBIASED std (scale of the noise).
    std = jnp.sqrt(ssq * (1.0 / (valid_d - 1)))

    # out = alpha*normed + beta
    #     = a_s*normed + (a_s*std)*(z1*normed) + b_s*mean + (b_s*std)*z2
    a1 = alpha_scale * std        # [tm, 1]
    b0 = beta_scale * mean        # [tm, 1]
    b1 = beta_scale * std         # [tm, 1]

    z1 = get_z1()
    acc = alpha_scale * normed + a1 * (z1 * normed) + b0
    z2 = get_z2()
    return acc + b1 * z2


# ---------------------------------------------------------------------------
# Kernel bodies
# ---------------------------------------------------------------------------
def _prng_kernel(seed_ref, x_ref, o_ref, *, alpha_scale, beta_scale, valid_d):
    """Fast path: noise drawn on-chip with the TPU hardware PRNG."""
    pltpu.prng_seed(seed_ref[0] + pl.program_id(0) * _SEED_MIX)
    x = x_ref[...].astype(jnp.float32)
    out = _augment_math(
        x,
        lambda: pltpu.stateful_normal(x.shape, jnp.float32),
        lambda: pltpu.stateful_normal(x.shape, jnp.float32),
        alpha_scale=alpha_scale, beta_scale=beta_scale, valid_d=valid_d)
    o_ref[...] = out.astype(o_ref.dtype)


def _noise_kernel(x_ref, z1_ref, z2_ref, o_ref, *, alpha_scale, beta_scale, valid_d):
    """Portable path: noise streamed in (exact validation / non-TPU backends)."""
    x = x_ref[...].astype(jnp.float32)
    out = _augment_math(
        x,
        lambda: z1_ref[...].astype(jnp.float32),
        lambda: z2_ref[...].astype(jnp.float32),
        alpha_scale=alpha_scale, beta_scale=beta_scale, valid_d=valid_d)
    o_ref[...] = out.astype(o_ref.dtype)


# ---------------------------------------------------------------------------
# Tiling heuristics
# ---------------------------------------------------------------------------
def _tpu_vmem_bytes():
    try:
        if jax.default_backend() == "tpu":
            info = pltpu.get_tpu_info()
            return int(getattr(info, "vmem_capacity_bytes", 128 << 20))
    except Exception:
        pass
    return 128 << 20


def _pick_row_tile(n, d_pad, *, n_streams, vmem_bytes):
    """Largest multiple-of-8 row count whose [rows, d_pad] f32 block fits the
    per-generation budget (full D per block — the reduction is over D)."""
    # v7x has 64 MiB VMEM -> smaller blocks; v5e/v6e have 128 MiB.
    base = (4 << 20) if vmem_bytes <= (64 << 20) else (8 << 20)
    if n_streams > 2:          # streamed-noise path moves 4 arrays, halve blocks
        base //= 2
    rows = base // max(1, d_pad * 4)
    rows = max(8, (rows // 8) * 8)
    # TODO(synk): chunk the elementwise epilogue over D for very wide rows
    # (D ≳ 64K f32) instead of letting a single 8-row block exceed the budget.
    if rows >= n:
        return n               # full array along rows -> exempt from (8,128) rule
    return rows


def _adjust_even_grid(n, row_tile):
    """Prefer an even number of blocks so v7x's 2 TensorCores stay balanced."""
    grid = pl.cdiv(n, row_tile)
    if grid > 1 and grid % 2 == 1:
        alt = -(-n // (grid + 1))
        alt = max(8, ((alt + 7) // 8) * 8)
        if alt < row_tile and pl.cdiv(n, alt) % 2 == 0:
            return alt
    return row_tile


# ---------------------------------------------------------------------------
# Wrapper
# ---------------------------------------------------------------------------
def normal_augmenter(features, seed=0, *, alpha_scale=1.0, beta_scale=1.0,
                     z1=None, z2=None, row_tile=None):
    """Pallas implementation of NormalAugmenter.forward for 2D [N, D] features.

    If z1/z2 are given (shape [N, D], ~N(0,1)) they are streamed in and the
    result matches the pure-JAX reference exactly; otherwise noise is drawn
    on-chip with the TPU HW PRNG (falling back to jax.random off-TPU).
    """
    n, d = features.shape
    assert d >= 2, "unbiased std over dim=1 requires length >= 2"
    alpha_scale = float(alpha_scale)
    beta_scale = float(beta_scale)

    # Lane-dense output: pad D up to a multiple of 128 (stats masked in-kernel).
    pad = (-d) % 128
    d_pad = d + pad
    x_in = features if pad == 0 else jnp.pad(features, ((0, 0), (0, pad)))

    use_hw_prng = (z1 is None and z2 is None and jax.default_backend() == "tpu")
    if not use_hw_prng and (z1 is None or z2 is None):
        # Non-TPU fallback: draw the noise with jax.random at padded width.
        k1, k2 = jax.random.split(jax.random.PRNGKey(int(seed)))
        z1p = jax.random.normal(k1, (n, d_pad), jnp.float32)
        z2p = jax.random.normal(k2, (n, d_pad), jnp.float32)
    elif not use_hw_prng:
        z1p = z1 if pad == 0 else jnp.pad(z1, ((0, 0), (0, pad)))
        z2p = z2 if pad == 0 else jnp.pad(z2, ((0, 0), (0, pad)))

    vmem_bytes = _tpu_vmem_bytes()
    vmem_limit = min(vmem_bytes * 3 // 4, 96 << 20)   # 48 MiB on v7x, 96 MiB else
    n_streams = 2 if use_hw_prng else 4

    if row_tile is None:
        row_tile = _pick_row_tile(n, d_pad, n_streams=n_streams, vmem_bytes=vmem_bytes)
    row_tile = min(int(row_tile), n)
    if row_tile < n:
        row_tile = max(8, (row_tile // 8) * 8)
        row_tile = _adjust_even_grid(n, row_tile)
    grid = pl.cdiv(n, row_tile)

    cp = pltpu.CompilerParams(
        dimension_semantics=("parallel",),        # shards blocks across TCs on v7x
        vmem_limit_bytes=int(vmem_limit),
    )
    out_shape = jax.ShapeDtypeStruct((n, d_pad), features.dtype)

    if use_hw_prng:
        # index_maps receive the scalar-prefetch ref as a trailing positional arg.
        spec = pl.BlockSpec((row_tile, d_pad), lambda i, seed_ref: (i, 0))
        kernel = functools.partial(_prng_kernel, alpha_scale=alpha_scale,
                                   beta_scale=beta_scale, valid_d=d)
        out = pl.pallas_call(
            kernel,
            out_shape=out_shape,
            grid_spec=pltpu.PrefetchScalarGridSpec(
                num_scalar_prefetch=1,            # RNG seed lands in SMEM
                grid=(grid,),
                in_specs=[spec],
                out_specs=spec),
            compiler_params=cp,
        )(jnp.asarray([seed], dtype=jnp.int32), x_in)
    else:
        spec = pl.BlockSpec((row_tile, d_pad), lambda i: (i, 0))
        kernel = functools.partial(_noise_kernel, alpha_scale=alpha_scale,
                                   beta_scale=beta_scale, valid_d=d)
        out = pl.pallas_call(
            kernel,
            out_shape=out_shape,
            grid=(grid,),
            in_specs=[spec, spec, spec],
            out_specs=spec,
            compiler_params=cp,
        )(x_in, z1p, z2p)

    return out if pad == 0 else out[:, :d]


# ---------------------------------------------------------------------------
# Pure-JAX reference (mirrors the PyTorch module, given the noise draws)
# ---------------------------------------------------------------------------
def _reference(features, z1, z2, alpha_scale=1.0, beta_scale=1.0):
    x = features.astype(jnp.float32)
    d = x.shape[-1]
    mean = jnp.mean(x, axis=-1, keepdims=True)
    diff = x - mean
    ssq = jnp.sum(diff * diff, axis=-1, keepdims=True)
    std = jnp.sqrt(ssq / (d - 1))                     # unbiased (torch.std_mean)
    normed = diff / jnp.sqrt(ssq / d + _EPS)          # InstanceNorm1d: biased var
    alpha = alpha_scale * (1.0 + std * z1)
    beta = beta_scale * (mean + std * z2)
    return alpha * normed + beta


if __name__ == "__main__":
    # feature_size = 16 rows, length = 128 (lane-friendly, still small).
    N, D = 16, 128
    alpha_scale, beta_scale = 1.0, 1.0
    seed = 0

    key = jax.random.PRNGKey(0)
    kx, k1, k2 = jax.random.split(key, 3)
    features = jax.random.normal(kx, (N, D), dtype=jnp.float32) * 2.0 + 0.5
    z1 = jax.random.normal(k1, (N, D), dtype=jnp.float32)
    z2 = jax.random.normal(k2, (N, D), dtype=jnp.float32)

    # Validation path: noise supplied, so the kernel output can be checked
    # exactly against the pure-JAX reference using the same draws.
    out_dbg = normal_augmenter(features, seed, alpha_scale=alpha_scale,
                               beta_scale=beta_scale, z1=z1, z2=z2)
    out_dbg = jax.block_until_ready(out_dbg)
    ref = _reference(features, z1, z2, alpha_scale, beta_scale)
    assert out_dbg.shape == (N, D) and out_dbg.dtype == jnp.float32
    assert jnp.allclose(out_dbg, ref, atol=1e-4, rtol=1e-4), "mismatch vs reference"

    # Fast path: on a TPU backend the noise is drawn on-chip with the HW PRNG
    # (1 HBM read + 1 write per element); elsewhere it falls back to streamed
    # jax.random noise so the script still runs cleanly.
    out = normal_augmenter(features, seed, alpha_scale=alpha_scale,
                           beta_scale=beta_scale)
    out = jax.block_until_ready(out)
    assert out.shape == (N, D) and out.dtype == features.dtype
    assert bool(jnp.all(jnp.isfinite(out)))

    print("KERNEL_OK")
</pallas_src>

<mosaic_0001>
module attributes {stable_mosaic.version = 11 : i64} {
  func.func @_noise_kernel(%arg0: i32, %arg1: memref<16x128xf32, #tpu.memory_space<vmem>>, %arg2: memref<16x128xf32, #tpu.memory_space<vmem>>, %arg3: memref<16x128xf32, #tpu.memory_space<vmem>>, %arg4: memref<16x128xf32, #tpu.memory_space<vmem>>) attributes {dimension_semantics = [#tpu.dimension_semantics<parallel>], iteration_bounds = array<i64: 1>, scalar_prefetch = 0 : i64, scratch_operands = 0 : i64, tpu.core_type = #tpu.core_type<tc>, window_params = [{transform_indices = @transform_0, window_bounds = array<i64: 16, 128>}, {transform_indices = @transform_1, window_bounds = array<i64: 16, 128>}, {transform_indices = @transform_2, window_bounds = array<i64: 16, 128>}, {transform_indices = @transform_3, window_bounds = array<i64: 16, 128>}]} {
    %c0 = arith.constant 0 : index
    %c0_0 = arith.constant 0 : index
    %0 = vector.load %arg1[%c0, %c0_0] : memref<16x128xf32, #tpu.memory_space<vmem>>, vector<16x128xf32>
    %cst = arith.constant dense<0.000000e+00> : vector<16xf32>
    %1 = vector.multi_reduction <add>, %0, %cst [1] : vector<16x128xf32> to vector<16xf32>
    %2 = vector.shape_cast %1 : vector<16xf32> to vector<16x1xf32>
    %cst_1 = arith.constant 1.280000e+02 : f32
    %3 = vector.broadcast %cst_1 : f32 to vector<16x1xf32>
    %4 = arith.divf %2, %3 : vector<16x1xf32>
    %5 = vector.broadcast %4 : vector<16x1xf32> to vector<16x128xf32>
    %6 = arith.subf %0, %5 : vector<16x128xf32>
    %7 = arith.mulf %6, %6 : vector<16x128xf32>
    %cst_2 = arith.constant dense<0.000000e+00> : vector<16xf32>
    %8 = vector.multi_reduction <add>, %7, %cst_2 [1] : vector<16x128xf32> to vector<16xf32>
    %9 = vector.shape_cast %8 : vector<16xf32> to vector<16x1xf32>
    %cst_3 = arith.constant 7.812500e-03 : f32
    %10 = vector.broadcast %cst_3 : f32 to vector<16x1xf32>
    %11 = arith.mulf %9, %10 : vector<16x1xf32>
    %cst_4 = arith.constant 9.99999974E-6 : f32
    %12 = vector.broadcast %cst_4 : f32 to vector<16x1xf32>
    %13 = arith.addf %11, %12 : vector<16x1xf32>
    %14 = math.rsqrt %13 : vector<16x1xf32>
    %15 = vector.broadcast %14 : vector<16x1xf32> to vector<16x128xf32>
    %16 = arith.mulf %6, %15 : vector<16x128xf32>
    %cst_5 = arith.constant 0.00787401571 : f32
    %17 = vector.broadcast %cst_5 : f32 to vector<16x1xf32>
    %18 = arith.mulf %9, %17 : vector<16x1xf32>
    %19 = math.sqrt %18 : vector<16x1xf32>
    %cst_6 = arith.constant 1.000000e+00 : f32
    %20 = vector.broadcast %cst_6 : f32 to vector<16x1xf32>
    %21 = arith.mulf %20, %19 : vector<16x1xf32>
    %cst_7 = arith.constant 1.000000e+00 : f32
    %22 = vector.broadcast %cst_7 : f32 to vector<16x1xf32>
    %23 = arith.mulf %22, %4 : vector<16x1xf32>
    %cst_8 = arith.constant 1.000000e+00 : f32
    %24 = vector.broadcast %cst_8 : f32 to vector<16x1xf32>
    %25 = arith.mulf %24, %19 : vector<16x1xf32>
    %c0_9 = arith.constant 0 : index
    %c0_10 = arith.constant 0 : index
    %26 = vector.load %arg2[%c0_9, %c0_10] : memref<16x128xf32, #tpu.memory_space<vmem>>, vector<16x128xf32>
    %cst_11 = arith.constant 1.000000e+00 : f32
    %27 = vector.broadcast %cst_11 : f32 to vector<16x128xf32>
    %28 = arith.mulf %27, %16 : vector<16x128xf32>
    %29 = arith.mulf %26, %16 : vector<16x128xf32>
    %30 = vector.broadcast %21 : vector<16x1xf32> to vector<16x128xf32>
    %31 = arith.mulf %30, %29 : vector<16x128xf32>
    %32 = arith.addf %28, %31 : vector<16x128xf32>
    %33 = vector.broadcast %23 : vector<16x1xf32> to vector<16x128xf32>
    %34 = arith.addf %32, %33 : vector<16x128xf32>
    %c0_12 = arith.constant 0 : index
    %c0_13 = arith.constant 0 : index
    %35 = vector.load %arg3[%c0_12, %c0_13] : memref<16x128xf32, #tpu.memory_space<vmem>>, vector<16x128xf32>
    %36 = vector.broadcast %25 : vector<16x1xf32> to vector<16x128xf32>
    %37 = arith.mulf %36, %35 : vector<16x128xf32>
    %38 = arith.addf %34, %37 : vector<16x128xf32>
    %c0_14 = arith.constant 0 : index
    %c0_15 = arith.constant 0 : index
    %39 = vector.load %arg4[%c0_14, %c0_15] : memref<16x128xf32, #tpu.memory_space<vmem>>, vector<16x128xf32>
    tpu.vector_store %arg4[%c0_14, %c0_15], %38 {strides = array<i32>} : memref<16x128xf32, #tpu.memory_space<vmem>>, vector<16x128xf32>,
    return
  }
  func.func @transform_0(%arg0: i32) -> (i32, i32) {
    %c0_i32 = arith.constant 0 : i32
    %c0_i32_0 = arith.constant 0 : i32
    return %arg0, %c0_i32 : i32, i32
  }
  func.func @transform_1(%arg0: i32) -> (i32, i32) {
    %c0_i32 = arith.constant 0 : i32
    %c0_i32_0 = arith.constant 0 : i32
    return %arg0, %c0_i32 : i32, i32
  }
  func.func @transform_2(%arg0: i32) -> (i32, i32) {
    %c0_i32 = arith.constant 0 : i32
    %c0_i32_0 = arith.constant 0 : i32
    return %arg0, %c0_i32 : i32, i32
  }
  func.func @transform_3(%arg0: i32) -> (i32, i32) {
    %c0_i32 = arith.constant 0 : i32
    %c0_i32_0 = arith.constant 0 : i32
    return %arg0, %c0_i32 : i32, i32
  }
}

</mosaic_0001>

<llo_original>
// kernel: tpu_custom_call.1
$region0: #{tpu_custom_call.1}
  #allocation0 [shape = 'u32[]', space=smem, size = 0x4, offset = 0x4, fixed_abs, tag = 'smem constant byte address 0x4 - core index']
  #allocation1 [shape = 'u32[72,128]{1,0:T(1,128)}', space=vmem, size = 0x9000, scoped, tag = 'internal scratch']
  %s0 = inlined_call_operand.hbm [shape: f32[16,128], index: 0, kind: input, shape index: {}]
  %s1 = inlined_call_operand.hbm [shape: f32[16,128], index: 1, kind: input, shape index: {}]
  %s2 = inlined_call_operand.hbm [shape: f32[16,128], index: 2, kind: input, shape index: {}]
  %s3 = inlined_call_operand.hbm [shape: f32[16,128], index: 3, kind: output, shape index: {}]
  %s4 = sld [smem:[#allocation0]]
  $region34: #{tpu_custom_call.1} parent=0
    _
  %s6 = ssub.s32 1, %s4
  %s7 = scalar_select 0, %s6, %s4
  $region1: #{tpu_custom_call.1} parent=0
    #allocation2 [shape = 'u8[8192]{0}', space=vmem, size = 0x2000, scoped, tag = 'input window, operand 0, single buffered']
    #allocation3 [shape = 's32[1]{0}', space=sflag, size = 0x4, scoped, tag = 'scoped memory for tpu_custom_call.1']
    #allocation4 [shape = 's32[1]{0}', space=sflag, size = 0x4, scoped, tag = 'scoped memory for tpu_custom_call.1']
    #allocation5 [shape = 'u8[8192]{0}', space=vmem, size = 0x2000, scoped, tag = 'input window, operand 1, single buffered']
    #allocation6 [shape = 's32[1]{0}', space=sflag, size = 0x4, scoped, tag = 'scoped memory for tpu_custom_call.1']
    #allocation7 [shape = 'u8[8192]{0}', space=vmem, size = 0x2000, scoped, tag = 'input window, operand 2, single buffered']
    #allocation8 [shape = 'u8[8192]{0}', space=vmem, size = 0x2000, scoped, tag = 'output window, operand 0, single buffered']
    %8 = vsyncpa [#allocation3], 0
    %9 = vsyncpa [#allocation6], 0
    %10 = vsyncpa [#allocation4], 0
    // Predicated region
    $region2: #{tpu_custom_call.1} parent=1 // pred_check
      _
    $region3: #{tpu_custom_call.1} parent=1 // pred_check_branch
      %12 = sbr.rel (0) target = $region5
    $region4: #{tpu_custom_call.1} parent=1 // pred_region
      %14 = vsyncadd [#allocation3], 0
      %s15 = sshll.u32 %s0, 4
      %s16 = int_to_ptr.hbm [resolvable:$true] %s15
      %s17 = sshll.u32 [#allocation2], 4
      %s18 = int_to_ptr.vmem [resolvable:$true] %s17
      %23 = dma.hbm_to_vmem [thread:$0]  %s16, 256, %s18, [#allocation3], 128, 128, 8
    $region5: #{tpu_custom_call.1} parent=1 // pred_fallthru
      _
    // Predicated region
    $region6: #{tpu_custom_call.1} parent=1 // pred_check
      _
    $region7: #{tpu_custom_call.1} parent=1 // pred_check_branch
      %25 = sbr.rel (0) target = $region9
    $region8: #{tpu_custom_call.1} parent=1 // pred_region
      %27 = vsyncadd [#allocation6], 0
      %s28 = sshll.u32 %s1, 4
      %s29 = int_to_ptr.hbm [resolvable:$true] %s28
      %s30 = sshll.u32 [#allocation5], 4
      %s31 = int_to_ptr.vmem [resolvable:$true] %s30
      %36 = dma.hbm_to_vmem [thread:$0]  %s29, 256, %s31, [#allocation6], 128, 128, 8
    $region9: #{tpu_custom_call.1} parent=1 // pred_fallthru
      _
    // Predicated region
    $region10: #{tpu_custom_call.1} parent=1 // pred_check
      _
    $region11: #{tpu_custom_call.1} parent=1 // pred_check_branch
      %38 = sbr.rel (0) target = $region13
    $region12: #{tpu_custom_call.1} parent=1 // pred_region
      %40 = vsyncadd [#allocation6], 0
      %s41 = sshll.u32 %s2, 4
      %s42 = int_to_ptr.hbm [resolvable:$true] %s41
      %s43 = sshll.u32 [#allocation7], 4
      %s44 = int_to_ptr.vmem [resolvable:$true] %s43
      %49 = dma.hbm_to_vmem [thread:$0]  %s42, 256, %s44, [#allocation6], 128, 128, 8
    $region13: #{tpu_custom_call.1} parent=1 // pred_fallthru
      _
    // Predicated region
    $region14: #{tpu_custom_call.1} parent=1 // pred_check
      _
    $region15: #{tpu_custom_call.1} parent=1 // pred_check_branch
      %51 = sbr.rel (0) target = $region17
    $region16: #{tpu_custom_call.1} parent=1 // pred_region
      %53 = dma.done [#allocation3], 256
    $region17: #{tpu_custom_call.1} parent=1 // pred_fallthru
      _
    // Predicated region
    $region18: #{tpu_custom_call.1} parent=1 // pred_check
      _
    $region19: #{tpu_custom_call.1} parent=1 // pred_check_branch
      %55 = sbr.rel (0) target = $region21
    $region20: #{tpu_custom_call.1} parent=1 // pred_region
      %57 = dma.done [#allocation6], 256
    $region21: #{tpu_custom_call.1} parent=1 // pred_fallthru
      _
    // Predicated region
    $region22: #{tpu_custom_call.1} parent=1 // pred_check
      _
    $region23: #{tpu_custom_call.1} parent=1 // pred_check_branch
      %59 = sbr.rel (0) target = $region25
    $region24: #{tpu_custom_call.1} parent=1 // pred_region
      %61 = dma.done [#allocation6], 256
    $region25: #{tpu_custom_call.1} parent=1 // pred_fallthru
      _
    %v62 = vld [vmem:[#allocation2] sm:$0xff]
    %v63 = vld [vmem:[#allocation2 + $0x8] sm:$0xff]
    %64 = vadd.xlane.f32.xlu0 %v62
    %v65 = vpop.xlane.xlu0 %64
    %66 = vadd.xlane.f32.xlu0 %v63
    %v67 = vpop.xlane.xlu0 %66
    %v68 = vrcp.pop 128.0
    %v69 = vmul.f32 128.0, %v68
    %v70 = vsub.f32 1.0, %v69
    %v71 = vmul.f32 %v68, %v70
    %v72 = vadd.f32 %v68, %v71
    %vm73 = vweird.f32 %v68
    %v74 = vsel %vm73, %v68, %v72
    %v75 = vmul.f32 %v65, %v74
    %v76 = vmul.f32 %v67, %v74
    %v77 = vsub.f32 %v62, %v75
    %v78 = vsub.f32 %v63, %v76
    %v79 = vmul.f32 %v77, %v77
    %v80 = vmul.f32 %v78, %v78
    %81 = vadd.xlane.f32.xlu0 %v79
    %v82 = vpop.xlane.xlu0 %81
    %83 = vadd.xlane.f32.xlu0 %v80
    %v84 = vpop.xlane.xlu0 %83
    %v85 = vmul.f32 %v82, 0.0078125
    %v86 = vmul.f32 %v84, 0.0078125
    %v87 = vadd.f32 %v85, 1e-05
    %v88 = vadd.f32 %v86, 1e-05
    %v89 = vrsqrt.pop %v87
    %v90 = vmul.f32 %v89, %v87
    %v91 = vmul.f32 %v90, %v89
    %v92 = vmul.f32 0.5, %v91
    %v93 = vsub.f32 1.5, %v92
    %v94 = vmul.f32 %v89, %v93
    %vm95 = vweird.f32 %v87
    %vm96 = vweird.f32 %v89
    %vm97 = vmor %vm95, %vm96
    %v98 = vsel %vm97, %v89, %v94
    %v99 = vrsqrt.pop %v88
    %v100 = vmul.f32 %v99, %v88
    %v101 = vmul.f32 %v100, %v99
    %v102 = vmul.f32 0.5, %v101
    %v103 = vsub.f32 1.5, %v102
    %v104 = vmul.f32 %v99, %v103
    %vm105 = vweird.f32 %v88
    %vm106 = vweird.f32 %v99
    %vm107 = vmor %vm105, %vm106
    %v108 = vsel %vm107, %v99, %v104
    %v109 = vmul.f32 %v77, %v98
    %v110 = vmul.f32 %v78, %v108
    %v111 = vmul.f32 %v82, 0.007874016
    %v112 = vmul.f32 %v84, 0.007874016
    %v113 = vrsqrt.pop %v111
    %v114 = vmul.f32 %v113, %v111
    %v115 = vmul.f32 %v114, %v113
    %v116 = vmul.f32 0.5, %v115
    %v117 = vsub.f32 1.5, %v116
    %v118 = vmul.f32 %v113, %v117
    %v119 = vmul.f32 %v111, %v118
    %vm120 = vcmp.eq.f32.partialorder %v111, inf
    %v121 = vsel %vm120, %v111, %v119
    %vm122 = vcmp.eq.f32.partialorder %v111, 0.0
    %v123 = vand.u32 %v111, 2147483648
    %v124 = vsel %vm122, %v123, %v121
    %v125 = vrsqrt.pop %v112
    %v126 = vmul.f32 %v125, %v112
    %v127 = vmul.f32 %v126, %v125
    %v128 = vmul.f32 0.5, %v127
    %v129 = vsub.f32 1.5, %v128
    %v130 = vmul.f32 %v125, %v129
    %v131 = vmul.f32 %v112, %v130
    %vm132 = vcmp.eq.f32.partialorder %v112, inf
    %v133 = vsel %vm132, %v112, %v131
    %vm134 = vcmp.eq.f32.partialorder %v112, 0.0
    %v135 = vand.u32 %v112, 2147483648
    %v136 = vsel %vm134, %v135, %v133
    %v137 = vld [vmem:[#allocation5] sm:$0xff]
    %v138 = vld [vmem:[#allocation5 + $0x8] sm:$0xff]
    %v139 = vmul.f32 %v137, %v109
    %v140 = vmul.f32 %v138, %v110
    %v141 = vmul.f32 %v124, %v139
    %v142 = vmul.f32 %v136, %v140
    %v143 = vadd.f32 %v109, %v141
    %v144 = vadd.f32 %v110, %v142
    %v145 = vadd.f32 %v143, %v75
    %v146 = vadd.f32 %v144, %v76
    %v147 = vld [vmem:[#allocation7] sm:$0xff]
    %v148 = vld [vmem:[#allocation7 + $0x8] sm:$0xff]
    %v149 = vmul.f32 %v124, %v147
    %v150 = vmul.f32 %v136, %v148
    %v151 = vadd.f32 %v145, %v149
    %v152 = vadd.f32 %v146, %v150
    %153 = vst [vmem:[#allocation8] sm:$0xff] %v151
    %154 = vst [vmem:[#allocation8 + $0x8] sm:$0xff] %v152
    // Predicated region
    $region26: #{tpu_custom_call.1} parent=1 // pred_check
      _
    $region27: #{tpu_custom_call.1} parent=1 // pred_check_branch
      %156 = sbr.rel (0) target = $region29
    $region28: #{tpu_custom_call.1} parent=1 // pred_region
      %158 = vsyncadd [#allocation4], 0
      %s159 = sshll.u32 [#allocation8], 4
      %s160 = int_to_ptr.vmem [resolvable:$true] %s159
      %s161 = sshll.u32 %s3, 4
      %s162 = int_to_ptr.hbm [resolvable:$true] %s161
      %167 = dma.vmem_to_hbm [thread:$0]  %s160, 256, %s162, [#allocation4], 128, 128, 8
    $region29: #{tpu_custom_call.1} parent=1 // pred_fallthru
      _
    // Predicated region
    $region30: #{tpu_custom_call.1} parent=1 // pred_check
      _
    $region31: #{tpu_custom_call.1} parent=1 // pred_check_branch
      %169 = sbr.rel (0) target = $region33
    $region32: #{tpu_custom_call.1} parent=1 // pred_region
      %171 = dma.done [#allocation4], 256
    $region33: #{tpu_custom_call.1} parent=1 // pred_fallthru
      _
    %172 = vsyncpa [#allocation3], 1
    %173 = vsyncpa [#allocation6], 1
    %174 = vsyncpa [#allocation4], 1

</llo_original>
